<compile_context>
chip_gen: v5e
topology: v5e:2x2
jax: 0.10.0
libtpu: 0.0.40
codegen_flags: <defaults>
</compile_context>

<pallas_src>
import functools

import jax
import jax.numpy as jnp
from jax.experimental import pallas as pl
from jax.experimental.pallas import tpu as pltpu


def _round_up(a: int, b: int) -> int:
    return (a + b - 1) // b * b


def _num_tensorcores() -> int:
    """2 on v7x (split small-M work across both TCs); 1 on v5e/v6e where the
    grid is a serial loop and extra blocks are pure per-step overhead."""
    try:
        kind = (jax.devices()[0].device_kind or "").lower()
    except Exception:
        return 1
    return 2 if "v7" in kind else 1


def _vmem_capacity_bytes() -> int:
    try:
        return int(pltpu.get_tpu_info().vmem_capacity_bytes)
    except Exception:
        return 64 << 20  # assume the smallest (v7x) if the query is unavailable


def _patch_embed_kernel(x_ref, w_ref, b_ref, o_ref):
    # x_ref: (tm, Kp) bf16   w_ref: (Kp, E) bf16   b_ref: (1, E) f32
    # o_ref: (tm, E) out_dtype (bf16 by default).
    acc = jnp.dot(x_ref[...], w_ref[...], preferred_element_type=jnp.float32)
    o_ref[...] = (acc + b_ref[...]).astype(o_ref.dtype)


def prepare_patch_embed_params(weight, bias):
    """One-time (parameter-load time) conversion of PyTorch Conv2d params.

    weight: (E, C, p, p) -> (Kp, E) bf16, flattened in (C, kh, kw) order and
    zero-padded along K to a multiple of 256.  bias: (E,) -> (1, E) f32.
    """
    E = weight.shape[0]
    K = weight.shape[1] * weight.shape[2] * weight.shape[3]
    Kp = _round_up(K, 256)
    wmat = weight.reshape(E, K).T.astype(jnp.bfloat16)          # (K, E)
    if Kp != K:
        wmat = jnp.pad(wmat, ((0, Kp - K), (0, 0)))
    bmat = bias.reshape(1, E).astype(jnp.float32)
    return wmat, bmat


def patch_embedder(x, wmat, bmat, *, patch_size, out_dtype=jnp.bfloat16):
    """x: (B, C, H, W) NCHW (as in PyTorch). wmat: (Kp, E) bf16. bmat: (1, E) f32.
    Returns (B, N, E) with N = (H//p)*(W//p)  ==  proj(x).flatten(2).transpose(1, 2).
    NOTE: bf16 GEMM operands / bf16 output are a deliberate precision tradeoff
    vs a strict f32 PyTorch Conv2d; accumulation and bias add are f32."""
    B, C, H, W = x.shape
    p = patch_size
    gh, gw = H // p, W // p
    N = gh * gw
    M = B * N
    K = C * p * p
    Kp, E = wmat.shape

    # Patchify in bf16 (half the copy traffic); per-patch flatten order is
    # (C, kh, kw), matching the Conv2d weight reduction order used for wmat.
    # Kept as a single producer expression so the astype+transpose+reshape
    # (and any K pad) collapse into one fused copy that allow_input_fusion can
    # pull into the kernel's input DMA stream.
    xp = x.astype(jnp.bfloat16).reshape(B, C, gh, p, gw, p)
    xp = jnp.transpose(xp, (0, 2, 4, 1, 3, 5)).reshape(M, K)

    # M-tiling.
    if M >= 1024:
        tm, M_pad = 512, M          # ragged trailing block; no M-pad copy
    elif M >= 512:
        tm, M_pad = 256, M
    else:
        M16 = _round_up(M, 16)      # bf16 sublane packing: keep tm % 16 == 0
        ntc = _num_tensorcores()
        if ntc > 1 and M16 >= 32:
            tm = _round_up(M16 // 2, 16)
        else:
            tm = M16
        M_pad = _round_up(M, tm)

    if M_pad != M or Kp != K:
        # K columns zero-padded so they multiply the zero-padded weight rows.
        xp = jnp.pad(xp, ((0, M_pad - M), (0, Kp - K)))

    grid_m = pl.cdiv(M_pad, tm)
    out_bytes = jnp.dtype(out_dtype).itemsize

    # VMEM budget: double-buffered x/out tiles + single-buffered weight/bias,
    # capped per chip (v7x: 64 MiB physical VMEM).
    vmem_bytes = (2 * tm * Kp * 2            # x tiles (bf16, double-buffered)
                  + 2 * tm * E * out_bytes   # out tiles (double-buffered)
                  + Kp * E * 2               # weight (Buffered(1), resident)
                  + E * 4)                   # bias
    vmem_cap = _vmem_capacity_bytes()
    vmem_limit = int(min(max(2 * vmem_bytes, 16 << 20), int(0.6 * vmem_cap)))

    cost = pl.CostEstimate(
        flops=2 * M_pad * Kp * E,
        transcendentals=0,
        bytes_accessed=M_pad * Kp * 2 + Kp * E * 2 + M_pad * E * out_bytes,
    )

    out = pl.pallas_call(
        _patch_embed_kernel,
        out_shape=jax.ShapeDtypeStruct((M_pad, E), out_dtype),
        grid_spec=pltpu.PrefetchScalarGridSpec(
            num_scalar_prefetch=0,
            grid=(grid_m,),
            in_specs=[
                pl.BlockSpec((tm, Kp), lambda i: (i, 0)),
                # Constant index_maps: DMA'd once; single-buffered to reclaim
                # the spare pipeline buffer (funds larger tm on v7x's VMEM).
                pl.BlockSpec((Kp, E), lambda i: (0, 0),
                             pipeline_mode=pl.Buffered(1)),
                pl.BlockSpec((1, E), lambda i: (0, 0),
                             pipeline_mode=pl.Buffered(1)),
            ],
            out_specs=pl.BlockSpec((tm, E), lambda i: (i, 0)),
        ),
        compiler_params=pltpu.CompilerParams(
            dimension_semantics=("parallel",),
            vmem_limit_bytes=vmem_limit,
            # Let XLA fuse the patch-unfold copy into the kernel input stream
            # instead of materializing the unfolded activations in HBM.
            allow_input_fusion=[True, False, False],
        ),
        cost_estimate=cost,
    )(xp, wmat, bmat)

    return out[:M].reshape(B, N, E)


def _reference(x, weight, bias, patch_size):
    # Same math (bf16 operands, f32 accumulation) via XLA conv:
    # proj(x) -> flatten(2) -> transpose(1, 2).  Kept in f32 for comparison.
    y = jax.lax.conv_general_dilated(
        x.astype(jnp.bfloat16), weight.astype(jnp.bfloat16),
        window_strides=(patch_size, patch_size),
        padding="VALID",
        dimension_numbers=("NCHW", "OIHW", "NCHW"),
        preferred_element_type=jnp.float32,
    ) + bias.reshape(1, -1, 1, 1).astype(jnp.float32)
    B, E, gh, gw = y.shape
    return jnp.transpose(y.reshape(B, E, gh * gw), (0, 2, 1))


if __name__ == "__main__":
    # Small shapes consistent with the module: B=2, C=4, H=W=32, patch=8, E=128.
    patch_size = 8
    in_channels = 4
    embed_dim = 128
    B, H, W = 2, 32, 32

    key = jax.random.PRNGKey(0)
    kx, kw, kb = jax.random.split(key, 3)

    x = jax.random.normal(kx, (B, in_channels, H, W), dtype=jnp.float32)
    # Deterministic Conv2d-style init (scaled normal; synthetic weights).
    fan_in = in_channels * patch_size * patch_size
    weight = jax.random.normal(
        kw, (embed_dim, in_channels, patch_size, patch_size),
        dtype=jnp.float32) * (1.0 / fan_in) ** 0.5
    bias = jax.random.normal(kb, (embed_dim,), dtype=jnp.float32) * 0.01

    # One-time parameter prep (reshape/transpose/cast), outside the per-call path.
    wmat, bmat = prepare_patch_embed_params(weight, bias)

    fn = jax.jit(functools.partial(patch_embedder, patch_size=patch_size))
    out = jax.block_until_ready(fn(x, wmat, bmat))

    ref = _reference(x, weight, bias, patch_size)
    N = (H // patch_size) * (W // patch_size)
    assert out.shape == (B, N, embed_dim)
    assert out.dtype == jnp.bfloat16
    err = float(jnp.max(jnp.abs(out.astype(jnp.float32) - ref)))
    assert err < 5e-2, err
    print("KERNEL_OK")
</pallas_src>

<mosaic_0001>
module attributes {stable_mosaic.version = 11 : i64} {
  func.func @_patch_embed_kernel(%arg0: i32, %arg1: memref<32x256xbf16, #tpu.memory_space<vmem>>, %arg2: memref<256x128xbf16, #tpu.memory_space<vmem>>, %arg3: memref<1x128xf32, #tpu.memory_space<vmem>>, %arg4: memref<32x128xbf16, #tpu.memory_space<vmem>>) attributes {dimension_semantics = [#tpu.dimension_semantics<parallel>], iteration_bounds = array<i64: 1>, scalar_prefetch = 0 : i64, scratch_operands = 0 : i64, tpu.core_type = #tpu.core_type<tc>, window_params = [{transform_indices = @transform_0, window_bounds = array<i64: 32, 256>}, {pipeline_mode = #tpu.pipeline_mode<synchronous>, transform_indices = @transform_1, window_bounds = array<i64: 256, 128>}, {pipeline_mode = #tpu.pipeline_mode<synchronous>, transform_indices = @transform_2, window_bounds = array<i64: 1, 128>}, {transform_indices = @transform_3, window_bounds = array<i64: 32, 128>}]} {
    %c0 = arith.constant 0 : index
    %c0_0 = arith.constant 0 : index
    %0 = vector.load %arg1[%c0, %c0_0] : memref<32x256xbf16, #tpu.memory_space<vmem>>, vector<32x256xbf16>
    %c0_1 = arith.constant 0 : index
    %c0_2 = arith.constant 0 : index
    %1 = vector.load %arg2[%c0_1, %c0_2] : memref<256x128xbf16, #tpu.memory_space<vmem>>, vector<256x128xbf16>
    %cst = arith.constant dense<0.000000e+00> : vector<32x128xf32>
    %2 = tpu.matmul %0, %1, %cst {dimension_numbers = #tpu.dot_dimension_numbers<[1], [0], [0], [1], [0, 0, 1, 1], [], []>} : vector<32x256xbf16>, vector<256x128xbf16>, vector<32x128xf32> -> vector<32x128xf32>
    %c0_3 = arith.constant 0 : index
    %c0_4 = arith.constant 0 : index
    %3 = vector.load %arg3[%c0_3, %c0_4] : memref<1x128xf32, #tpu.memory_space<vmem>>, vector<1x128xf32>
    %4 = vector.broadcast %3 : vector<1x128xf32> to vector<32x128xf32>
    %5 = arith.addf %2, %4 : vector<32x128xf32>
    %6 = arith.truncf %5 : vector<32x128xf32> to vector<32x128xbf16>
    %c0_5 = arith.constant 0 : index
    %c0_6 = arith.constant 0 : index
    %7 = vector.load %arg4[%c0_5, %c0_6] : memref<32x128xbf16, #tpu.memory_space<vmem>>, vector<32x128xbf16>
    tpu.vector_store %arg4[%c0_5, %c0_6], %6 {strides = array<i32>} : memref<32x128xbf16, #tpu.memory_space<vmem>>, vector<32x128xbf16>,
    return
  }
  func.func @transform_0(%arg0: i32) -> (i32, i32) {
    %c0_i32 = arith.constant 0 : i32
    %c0_i32_0 = arith.constant 0 : i32
    return %arg0, %c0_i32 : i32, i32
  }
  func.func @transform_1(%arg0: i32) -> (i32, i32) {
    %c0_i32 = arith.constant 0 : i32
    %c0_i32_0 = arith.constant 0 : i32
    %c0_i32_1 = arith.constant 0 : i32
    return %c0_i32, %c0_i32_0 : i32, i32
  }
  func.func @transform_2(%arg0: i32) -> (i32, i32) {
    %c0_i32 = arith.constant 0 : i32
    %c0_i32_0 = arith.constant 0 : i32
    %c0_i32_1 = arith.constant 0 : i32
    return %c0_i32, %c0_i32_0 : i32, i32
  }
  func.func @transform_3(%arg0: i32) -> (i32, i32) {
    %c0_i32 = arith.constant 0 : i32
    %c0_i32_0 = arith.constant 0 : i32
    return %arg0, %c0_i32 : i32, i32
  }
}

</mosaic_0001>

<llo_original>
// kernel: patch_embedder.1
$region0: #{patch_embedder.1}
  #allocation0 [shape = 'u32[]', space=smem, size = 0x4, offset = 0x4, fixed_abs, tag = 'smem constant byte address 0x4 - core index']
  #allocation1 [shape = 'u32[72,128]{1,0:T(1,128)}', space=vmem, size = 0x9000, scoped, tag = 'internal scratch']
  %s0 = inlined_call_operand.vmem [shape: bf16[32,256], index: 0, kind: input, shape index: {}]
  %s1 = inlined_call_operand.vmem [shape: bf16[256,128], index: 1, kind: input, shape index: {}]
  %s2 = inlined_call_operand.vmem [shape: f32[1,128], index: 2, kind: input, shape index: {}]
  %s3 = inlined_call_operand.hbm [shape: bf16[32,128], index: 3, kind: output, shape index: {}]
  %s4 = sld [smem:[#allocation0]]
  $region22: #{patch_embedder.1} parent=0
    _
  %s6 = ssub.s32 1, %s4
  %s7 = scalar_select 0, %s6, %s4
  $region1: #{patch_embedder.1} parent=0
    #allocation2 [shape = 'u8[8192]{0}', space=vmem, size = 0x2000, scoped, tag = 'output window, operand 0, single buffered']
    #allocation3 [shape = 's32[1]{0}', space=sflag, size = 0x4, scoped, tag = 'scoped memory for patch_embedder.1']
    %8 = vsyncpa [#allocation3], 0
    // Predicated region
    $region2: #{patch_embedder.1} parent=1 // pred_check
      _
    $region3: #{patch_embedder.1} parent=1 // pred_check_branch
      %10 = sbr.rel (0) target = $region5
    $region4: #{patch_embedder.1} parent=1 // pred_region
      _
    $region5: #{patch_embedder.1} parent=1 // pred_fallthru
      _
    // Predicated region
    $region6: #{patch_embedder.1} parent=1 // pred_check
      _
    $region7: #{patch_embedder.1} parent=1 // pred_check_branch
      %12 = sbr.rel (0) target = $region9
    $region8: #{patch_embedder.1} parent=1 // pred_region
      _
    $region9: #{patch_embedder.1} parent=1 // pred_fallthru
      _
    // Predicated region
    $region10: #{patch_embedder.1} parent=1 // pred_check
      _
    $region11: #{patch_embedder.1} parent=1 // pred_check_branch
      %14 = sbr.rel (0) target = $region13
    $region12: #{patch_embedder.1} parent=1 // pred_region
      _
    $region13: #{patch_embedder.1} parent=1 // pred_fallthru
      _
    %v15 = vld [vmem:[%s0] sm:$0xff]
    %v16 = vld [vmem:[%s0 + $0x8] sm:$0xff]
    %v17 = vld [vmem:[%s0 + $0x10] sm:$0xff]
    %v18 = vld [vmem:[%s0 + $0x18] sm:$0xff]
    %v19 = vld [vmem:[%s1] sm:$0xf]
    %v20 = vld [vmem:[%s1 + $0x4] sm:$0xf]
    %v21 = vld [vmem:[%s1 + $0x8] sm:$0xf]
    %v22 = vld [vmem:[%s1 + $0xc] sm:$0xf]
    %v23 = vld [vmem:[%s1 + $0x10] sm:$0xf]
    %v24 = vld [vmem:[%s1 + $0x14] sm:$0xf]
    %v25 = vld [vmem:[%s1 + $0x18] sm:$0xf]
    %v26 = vld [vmem:[%s1 + $0x1c] sm:$0xf]
    %v27 = vld [vmem:[%s1 + $0x20] sm:$0xf]
    %v28 = vld [vmem:[%s1 + $0x24] sm:$0xf]
    %v29 = vld [vmem:[%s1 + $0x28] sm:$0xf]
    %v30 = vld [vmem:[%s1 + $0x2c] sm:$0xf]
    %v31 = vld [vmem:[%s1 + $0x30] sm:$0xf]
    %v32 = vld [vmem:[%s1 + $0x34] sm:$0xf]
    %v33 = vld [vmem:[%s1 + $0x38] sm:$0xf]
    %v34 = vld [vmem:[%s1 + $0x3c] sm:$0xf]
    %v35 = vld [vmem:[%s1 + $0x40] sm:$0xf]
    %v36 = vld [vmem:[%s1 + $0x44] sm:$0xf]
    %v37 = vld [vmem:[%s1 + $0x48] sm:$0xf]
    %v38 = vld [vmem:[%s1 + $0x4c] sm:$0xf]
    %v39 = vld [vmem:[%s1 + $0x50] sm:$0xf]
    %v40 = vld [vmem:[%s1 + $0x54] sm:$0xf]
    %v41 = vld [vmem:[%s1 + $0x58] sm:$0xf]
    %v42 = vld [vmem:[%s1 + $0x5c] sm:$0xf]
    %v43 = vld [vmem:[%s1 + $0x60] sm:$0xf]
    %v44 = vld [vmem:[%s1 + $0x64] sm:$0xf]
    %v45 = vld [vmem:[%s1 + $0x68] sm:$0xf]
    %v46 = vld [vmem:[%s1 + $0x6c] sm:$0xf]
    %v47 = vld [vmem:[%s1 + $0x70] sm:$0xf]
    %v48 = vld [vmem:[%s1 + $0x74] sm:$0xf]
    %v49 = vld [vmem:[%s1 + $0x78] sm:$0xf]
    %v50 = vld [vmem:[%s1 + $0x7c] sm:$0xf]
    %v51 = vld [vmem:[%s2] sm:$0x1]
    %v53 = vperm.slane %v51, 0
    %v59 = vunpack.c.l.b16 %v15
    %v60 = vunpack.c.h.b16 %v15
    %v61 = vunpack.c.l.b16 %v16
    %v62 = vunpack.c.h.b16 %v16
    %v63 = vunpack.c.l.b16 %v17
    %v64 = vunpack.c.h.b16 %v17
    %v65 = vunpack.c.l.b16 %v18
    %v66 = vunpack.c.h.b16 %v18
    %v67 = vpack.c.b16 %v61, %v59
    %v68 = vpack.c.b16 %v62, %v60
    %v69 = vpack.c.b16 %v65, %v63
    %v70 = vpack.c.b16 %v66, %v64
    %v107 = vunpack.c.l.b16 %v19
    %v108 = vunpack.c.l.b16 %v20
    %v109 = vunpack.c.l.b16 %v21
    %v110 = vunpack.c.l.b16 %v22
    %v111 = vunpack.c.l.b16 %v23
    %v112 = vunpack.c.l.b16 %v24
    %v113 = vunpack.c.l.b16 %v25
    %v114 = vunpack.c.l.b16 %v26
    %v115 = vunpack.c.l.b16 %v27
    %v116 = vunpack.c.l.b16 %v28
    %v117 = vunpack.c.l.b16 %v29
    %v118 = vunpack.c.l.b16 %v30
    %v119 = vunpack.c.l.b16 %v31
    %v120 = vunpack.c.l.b16 %v32
    %v121 = vunpack.c.l.b16 %v33
    %v122 = vunpack.c.l.b16 %v34
    %v123 = vunpack.c.l.b16 %v35
    %v124 = vunpack.c.l.b16 %v36
    %v125 = vunpack.c.l.b16 %v37
    %v126 = vunpack.c.l.b16 %v38
    %v127 = vunpack.c.l.b16 %v39
    %v128 = vunpack.c.l.b16 %v40
    %v129 = vunpack.c.l.b16 %v41
    %v130 = vunpack.c.l.b16 %v42
    %v131 = vunpack.c.l.b16 %v43
    %v132 = vunpack.c.l.b16 %v44
    %v133 = vunpack.c.l.b16 %v45
    %v134 = vunpack.c.l.b16 %v46
    %v135 = vunpack.c.l.b16 %v47
    %v136 = vunpack.c.l.b16 %v48
    %v137 = vunpack.c.l.b16 %v49
    %v138 = vunpack.c.l.b16 %v50
    %v139 = vpack.c.b16 %v108, %v107
    %v140 = vpack.c.b16 %v110, %v109
    %v141 = vpack.c.b16 %v112, %v111
    %v142 = vpack.c.b16 %v114, %v113
    %v143 = vpack.c.b16 %v116, %v115
    %v144 = vpack.c.b16 %v118, %v117
    %v145 = vpack.c.b16 %v120, %v119
    %v146 = vpack.c.b16 %v122, %v121
    %v147 = vpack.c.b16 %v124, %v123
    %v148 = vpack.c.b16 %v126, %v125
    %v149 = vpack.c.b16 %v128, %v127
    %v150 = vpack.c.b16 %v130, %v129
    %v151 = vpack.c.b16 %v132, %v131
    %v152 = vpack.c.b16 %v134, %v133
    %v153 = vpack.c.b16 %v136, %v135
    %v154 = vpack.c.b16 %v138, %v137
    %171 = vmatpush.bf16.msra.mxu0 %v146
    %172 = vmatpush.bf16.msra.mxu0 %v145
    %173 = vmatpush.bf16.msra.mxu0 %v144
    %174 = vmatpush.bf16.msra.mxu0 %v143
    %175 = vmatpush.bf16.msra.mxu0 %v142
    %176 = vmatpush.bf16.msra.mxu0 %v141
    %177 = vmatpush.bf16.msra.mxu0 %v140
    %178 = vmatpush.bf16.msra.mxu0 %v139
    %179 = vmatmul.bf16.gmra.mxu0 %v67
    %v180 = vpop.f32.mrf.mxu0
    %v181 = vadd.f32 %v53, %v180
    %v182 = vpop.f32.mrf.mxu0
    %v183 = vadd.f32 %v53, %v182
    %184 = vmatmul.bf16.gmra.mxu0 %v69
    %v185 = vpop.f32.mrf.mxu0
    %v186 = vadd.f32 %v53, %v185
    %v187 = vpop.f32.mrf.mxu0
    %v188 = vadd.f32 %v53, %v187
    %189 = vdwg.mxu0
    %190 = vmatpush.bf16.msra.mxu0 %v154
    %191 = vmatpush.bf16.msra.mxu0 %v153
    %192 = vmatpush.bf16.msra.mxu0 %v152
    %193 = vmatpush.bf16.msra.mxu0 %v151
    %194 = vmatpush.bf16.msra.mxu0 %v150
    %195 = vmatpush.bf16.msra.mxu0 %v149
    %196 = vmatpush.bf16.msra.mxu0 %v148
    %197 = vmatpush.bf16.msra.mxu0 %v147
    %198 = vmatmul.bf16.gmra.mxu0 %v68
    %v199 = vpop.f32.mrf.mxu0
    %v200 = vadd.f32 %v181, %v199
    %v201 = vpop.f32.mrf.mxu0
    %v202 = vadd.f32 %v183, %v201
    %203 = vmatmul.bf16.gmra.mxu0 %v70
    %v204 = vpop.f32.mrf.mxu0
    %v205 = vadd.f32 %v186, %v204
    %v206 = vpop.f32.mrf.mxu0
    %v207 = vadd.f32 %v188, %v206
    %208 = vdwg.mxu0
    %v209 = vpack.c.bf16 %v200, %v200
    %v210 = vpack.c.bf16 %v202, %v202
    %v211 = vpack.c.bf16 %v205, %v205
    %v212 = vpack.c.bf16 %v207, %v207
    %213 = vst [vmem:[#allocation2] sm:$0xf] %v209
    %214 = vst [vmem:[#allocation2 + $0x4] sm:$0xf] %v210
    %215 = vst [vmem:[#allocation2 + $0x8] sm:$0xf] %v211
    %216 = vst [vmem:[#allocation2 + $0xc] sm:$0xf] %v212
    // Predicated region
    $region14: #{patch_embedder.1} parent=1 // pred_check
      _
    $region15: #{patch_embedder.1} parent=1 // pred_check_branch
      %218 = sbr.rel (0) target = $region17
    $region16: #{patch_embedder.1} parent=1 // pred_region
      %220 = vsyncadd [#allocation3], 0
      %s221 = sshll.u32 [#allocation2], 4
      %s222 = int_to_ptr.vmem [resolvable:$true] %s221
      %s223 = sshll.u32 %s3, 4
      %s224 = int_to_ptr.hbm [resolvable:$true] %s223
      %229 = dma.vmem_to_hbm [thread:$0]  %s222, 256, %s224, [#allocation3], 64, 64, 4
    $region17: #{patch_embedder.1} parent=1 // pred_fallthru
      _
    // Predicated region
    $region18: #{patch_embedder.1} parent=1 // pred_check
      _
    $region19: #{patch_embedder.1} parent=1 // pred_check_branch
      %231 = sbr.rel (0) target = $region21
    $region20: #{patch_embedder.1} parent=1 // pred_region
      %233 = dma.done [#allocation3], 256
    $region21: #{patch_embedder.1} parent=1 // pred_fallthru
      _
    %234 = vsyncpa [#allocation3], 1

</llo_original>
